<compile_context>
chip_gen: v7x
topology: tpu7x:2x2x1
jax: 0.10.0
libtpu: 0.0.40
codegen_flags: <defaults>
</compile_context>

<pallas_src>
import functools

import jax
import jax.numpy as jnp
from jax.experimental import pallas as pl
from jax.experimental.pallas import tpu as pltpu


# ----------------------------------------------------------------------------
# Fused kernel: QKV projection -> per-head attention -> output projection.
# ----------------------------------------------------------------------------

def _fused_cross_attn_kernel(xq_ref, xkv_ref, wq_ref, wk_ref, wv_ref,
                             wo_ref, bo_ref, o_ref, *, heads, scale):
    # xq_ref, xkv_ref : (1, 1, N, dim)  query-stream / key-value-stream inputs
    # wq/wk/wv_ref    : (1, dim, inner)
    # wo_ref          : (1, inner, dim)
    # bo_ref          : (1, 1, dim)  f32
    # o_ref           : (1, 1, N, dim)
    N = xq_ref.shape[2]
    inner = wq_ref.shape[2]
    dim_out = wo_ref.shape[2]
    d = inner // heads

    xq = xq_ref[0, 0]                       # (N, dim)  compute dtype
    xkv = xkv_ref[0, 0]                     # (N, dim)
    cdt = xq.dtype

    # QKV projections on the MXU, f32 accumulation.
    q = jnp.dot(xq, wq_ref[0], preferred_element_type=jnp.float32).astype(cdt)
    k = jnp.dot(xkv, wk_ref[0], preferred_element_type=jnp.float32).astype(cdt)
    v = jnp.dot(xkv, wv_ref[0], preferred_element_type=jnp.float32).astype(cdt)

    # Per-head attention (heads is small & static -> unrolled); the output
    # projection is folded in per head so the only store is the final
    # lane-dense (N, dim) slab.
    out = jnp.zeros((N, dim_out), dtype=jnp.float32)
    for h in range(heads):
        lo = h * d
        qh = q[:, lo:lo + d]                # (N, d)
        kh = k[:, lo:lo + d]
        vh = v[:, lo:lo + d]
        # dots[i, j] = qh[i, :] . kh[j, :]  (contract head dim, no transpose)
        dots = jax.lax.dot_general(qh, kh, (((1,), (1,)), ((), ())),
                                   preferred_element_type=jnp.float32) * scale
        dots = dots - jnp.max(dots, axis=-1, keepdims=True)      # f32 softmax
        p = jnp.exp(dots)
        p = p * pl.reciprocal(jnp.sum(p, axis=-1, keepdims=True), approx=True)
        oh = jnp.dot(p.astype(cdt), vh,
                     preferred_element_type=jnp.float32)          # (N, d)
        out = out + jnp.dot(oh.astype(cdt), wo_ref[0, lo:lo + d, :],
                            preferred_element_type=jnp.float32)   # (N, dim)

    out = out + bo_ref[0].astype(jnp.float32)                     # bias in f32
    o_ref[0, 0] = out.astype(o_ref.dtype)


# ----------------------------------------------------------------------------
# Wrapper
# ----------------------------------------------------------------------------

@functools.partial(jax.jit, static_argnames=("heads", "compute_dtype"))
def cross_attention(x1, x2, w_qkv1, w_qkv2, w_out1, b_out1, w_out2, b_out2,
                    *, heads, compute_dtype=jnp.bfloat16):
    """CrossAttention forward (inference; dropout == identity).

    x1, x2 : (B, N, dim)
    w_qkv* : (dim, 3 * inner)  (pre-transposed from PyTorch (3*inner, dim))
    w_out* : (inner, dim)      (pre-transposed)
    b_out* : (dim,)
    Returns (out1, out2), each (B, N, dim) in x1.dtype.
    """
    B, N, dim = x1.shape
    inner = w_qkv1.shape[1] // 3
    d_head = inner // heads
    scale = float(d_head) ** -0.5
    cdt = compute_dtype

    # Stack both streams; cast matmul operands to the compute dtype once
    # (bf16 by default: halves per-step weight DMA and uses the bf16 MXU).
    x = jnp.stack([x1, x2], axis=0).astype(cdt)                       # (2,B,N,dim)
    wq = jnp.stack([w_qkv1[:, :inner], w_qkv2[:, :inner]], 0).astype(cdt)
    wk = jnp.stack([w_qkv1[:, inner:2 * inner],
                    w_qkv2[:, inner:2 * inner]], 0).astype(cdt)
    wv = jnp.stack([w_qkv1[:, 2 * inner:], w_qkv2[:, 2 * inner:]], 0).astype(cdt)
    wo = jnp.stack([w_out1, w_out2], axis=0).astype(cdt)              # (2,inner,dim)
    bo = jnp.stack([b_out1, b_out2], axis=0).reshape(2, 1, dim).astype(jnp.float32)

    # Grid: (stream, batch). Output stream s takes q input AND q weights from
    # the OTHER stream (1 - s) purely via index_map -> no concat/copy glue.
    x_q_spec = pl.BlockSpec((1, 1, N, dim), lambda s, b: (1 - s, b, 0, 0))
    x_kv_spec = pl.BlockSpec((1, 1, N, dim), lambda s, b: (s, b, 0, 0))
    wq_spec = pl.BlockSpec((1, dim, inner), lambda s, b: (1 - s, 0, 0))
    w_self_spec = pl.BlockSpec((1, dim, inner), lambda s, b: (s, 0, 0))
    wo_spec = pl.BlockSpec((1, inner, dim), lambda s, b: (s, 0, 0))
    bo_spec = pl.BlockSpec((1, 1, dim), lambda s, b: (s, 0, 0))
    o_spec = pl.BlockSpec((1, 1, N, dim), lambda s, b: (s, b, 0, 0))

    out = pl.pallas_call(
        functools.partial(_fused_cross_attn_kernel, heads=heads, scale=scale),
        out_shape=jax.ShapeDtypeStruct((2, B, N, dim), x1.dtype),
        grid_spec=pltpu.PrefetchScalarGridSpec(
            num_scalar_prefetch=0,
            grid=(2, B),
            in_specs=[x_q_spec, x_kv_spec, wq_spec, w_self_spec, w_self_spec,
                      wo_spec, bo_spec],
            out_specs=o_spec,
        ),
        compiler_params=pltpu.CompilerParams(
            dimension_semantics=("parallel", "parallel")),
    )(x, x, wq, wk, wv, wo, bo)

    return out[0], out[1]


# ----------------------------------------------------------------------------
# Pure-JAX reference (mirrors the PyTorch forward exactly, high precision)
# ----------------------------------------------------------------------------

def _reference(x1, x2, w_qkv1, w_qkv2, w_out1, b_out1, w_out2, b_out2, *, heads):
    B, N, dim = x1.shape
    inner = w_qkv1.shape[1] // 3
    d = inner // heads
    scale = d ** -0.5
    hp = jax.lax.Precision.HIGHEST

    def split_heads(t):
        return jnp.transpose(t.reshape(B, N, heads, d), (0, 2, 1, 3))

    qkv1 = jnp.einsum("bnd,de->bne", x1, w_qkv1, precision=hp)
    qkv2 = jnp.einsum("bnd,de->bne", x2, w_qkv2, precision=hp)
    q1, k1, v1 = [split_heads(t) for t in jnp.split(qkv1, 3, axis=-1)]
    q2, k2, v2 = [split_heads(t) for t in jnp.split(qkv2, 3, axis=-1)]

    def attend(q, k, v):
        dots = jnp.einsum("bhid,bhjd->bhij", q, k, precision=hp) * scale
        attn = jax.nn.softmax(dots, axis=-1)
        o = jnp.einsum("bhij,bhjd->bhid", attn, v, precision=hp)
        return jnp.transpose(o, (0, 2, 1, 3)).reshape(B, N, inner)

    o1 = jnp.einsum("bne,ed->bnd", attend(q2, k1, v1), w_out1, precision=hp) + b_out1
    o2 = jnp.einsum("bne,ed->bnd", attend(q1, k2, v2), w_out2, precision=hp) + b_out2
    return o1, o2


if __name__ == "__main__":
    # Small but lane-aligned shapes: batch=2, seq=8, dim=128, heads=2, dim_head=64.
    B, N, DIM, HEADS, DIM_HEAD = 2, 8, 128, 2, 64
    INNER = HEADS * DIM_HEAD  # 128

    key = jax.random.PRNGKey(0)
    kx1, kx2, kq1, kq2, kw1, kb1, kw2, kb2 = jax.random.split(key, 8)

    x1 = jax.random.normal(kx1, (B, N, DIM), dtype=jnp.float32)
    x2 = jax.random.normal(kx2, (B, N, DIM), dtype=jnp.float32)

    # Parameters stored pre-transposed (in, out) so kernels do plain x @ W.
    w_qkv1 = jax.random.normal(kq1, (DIM, 3 * INNER), dtype=jnp.float32) * 0.05
    w_qkv2 = jax.random.normal(kq2, (DIM, 3 * INNER), dtype=jnp.float32) * 0.05
    w_out1 = jax.random.normal(kw1, (INNER, DIM), dtype=jnp.float32) * 0.05
    b_out1 = jax.random.normal(kb1, (DIM,), dtype=jnp.float32) * 0.05
    w_out2 = jax.random.normal(kw2, (INNER, DIM), dtype=jnp.float32) * 0.05
    b_out2 = jax.random.normal(kb2, (DIM,), dtype=jnp.float32) * 0.05

    ref1, ref2 = _reference(x1, x2, w_qkv1, w_qkv2, w_out1, b_out1,
                            w_out2, b_out2, heads=HEADS)

    # Default path: bf16 MXU operands, f32 accumulation / softmax.
    out1, out2 = cross_attention(x1, x2, w_qkv1, w_qkv2,
                                 w_out1, b_out1, w_out2, b_out2, heads=HEADS)
    out1 = jax.block_until_ready(out1)
    out2 = jax.block_until_ready(out2)
    assert out1.shape == (B, N, DIM) and out2.shape == (B, N, DIM)
    assert jnp.allclose(out1, ref1, atol=2.5e-2, rtol=2.5e-2), "bf16 out1 mismatch"
    assert jnp.allclose(out2, ref2, atol=2.5e-2, rtol=2.5e-2), "bf16 out2 mismatch"

    # f32-operand path: tighter-tolerance sanity check of the kernel math.
    f1, f2 = cross_attention(x1, x2, w_qkv1, w_qkv2, w_out1, b_out1,
                             w_out2, b_out2, heads=HEADS,
                             compute_dtype=jnp.float32)
    f1 = jax.block_until_ready(f1)
    f2 = jax.block_until_ready(f2)
    assert jnp.allclose(f1, ref1, atol=3e-3, rtol=3e-3), "f32 out1 mismatch"
    assert jnp.allclose(f2, ref2, atol=3e-3, rtol=3e-3), "f32 out2 mismatch"

    print("KERNEL_OK")
</pallas_src>

<mosaic_0001>
module attributes {stable_mosaic.version = 11 : i64} {
  func.func @_fused_cross_attn_kernel(%arg0: i32, %arg1: i32, %arg2: memref<1x1x8x128xbf16, #tpu.memory_space<vmem>>, %arg3: memref<1x1x8x128xbf16, #tpu.memory_space<vmem>>, %arg4: memref<1x128x128xbf16, #tpu.memory_space<vmem>>, %arg5: memref<1x128x128xbf16, #tpu.memory_space<vmem>>, %arg6: memref<1x128x128xbf16, #tpu.memory_space<vmem>>, %arg7: memref<1x128x128xbf16, #tpu.memory_space<vmem>>, %arg8: memref<1x1x128xf32, #tpu.memory_space<vmem>>, %arg9: memref<1x1x8x128xf32, #tpu.memory_space<vmem>>) attributes {dimension_semantics = [#tpu.dimension_semantics<parallel>, #tpu.dimension_semantics<parallel>], iteration_bounds = array<i64: 2, 2>, scalar_prefetch = 0 : i64, scratch_operands = 0 : i64, tpu.core_type = #tpu.core_type<tc>, window_params = [{transform_indices = @transform_0, window_bounds = array<i64: 1, 1, 8, 128>}, {transform_indices = @transform_1, window_bounds = array<i64: 1, 1, 8, 128>}, {transform_indices = @transform_2, window_bounds = array<i64: 1, 128, 128>}, {transform_indices = @transform_3, window_bounds = array<i64: 1, 128, 128>}, {transform_indices = @transform_4, window_bounds = array<i64: 1, 128, 128>}, {transform_indices = @transform_5, window_bounds = array<i64: 1, 128, 128>}, {transform_indices = @transform_6, window_bounds = array<i64: 1, 1, 128>}, {transform_indices = @transform_7, window_bounds = array<i64: 1, 1, 8, 128>}]} {
    %c0 = arith.constant 0 : index
    %c0_0 = arith.constant 0 : index
    %c0_1 = arith.constant 0 : index
    %c0_2 = arith.constant 0 : index
    %0 = vector.load %arg2[%c0, %c0_0, %c0_1, %c0_2] : memref<1x1x8x128xbf16, #tpu.memory_space<vmem>>, vector<1x1x8x128xbf16>
    %1 = vector.shape_cast %0 : vector<1x1x8x128xbf16> to vector<8x128xbf16>
    %c0_3 = arith.constant 0 : index
    %c0_4 = arith.constant 0 : index
    %c0_5 = arith.constant 0 : index
    %c0_6 = arith.constant 0 : index
    %2 = vector.load %arg3[%c0_3, %c0_4, %c0_5, %c0_6] : memref<1x1x8x128xbf16, #tpu.memory_space<vmem>>, vector<1x1x8x128xbf16>
    %3 = vector.shape_cast %2 : vector<1x1x8x128xbf16> to vector<8x128xbf16>
    %c0_7 = arith.constant 0 : index
    %c0_8 = arith.constant 0 : index
    %c0_9 = arith.constant 0 : index
    %4 = vector.load %arg4[%c0_7, %c0_8, %c0_9] : memref<1x128x128xbf16, #tpu.memory_space<vmem>>, vector<1x128x128xbf16>
    %5 = vector.shape_cast %4 : vector<1x128x128xbf16> to vector<128x128xbf16>
    %cst = arith.constant dense<0.000000e+00> : vector<8x128xf32>
    %6 = tpu.matmul %1, %5, %cst {dimension_numbers = #tpu.dot_dimension_numbers<[1], [0], [0], [1], [0, 0, 1, 1], [], []>} : vector<8x128xbf16>, vector<128x128xbf16>, vector<8x128xf32> -> vector<8x128xf32>
    %7 = arith.truncf %6 : vector<8x128xf32> to vector<8x128xbf16>
    %c0_10 = arith.constant 0 : index
    %c0_11 = arith.constant 0 : index
    %c0_12 = arith.constant 0 : index
    %8 = vector.load %arg5[%c0_10, %c0_11, %c0_12] : memref<1x128x128xbf16, #tpu.memory_space<vmem>>, vector<1x128x128xbf16>
    %9 = vector.shape_cast %8 : vector<1x128x128xbf16> to vector<128x128xbf16>
    %cst_13 = arith.constant dense<0.000000e+00> : vector<8x128xf32>
    %10 = tpu.matmul %3, %9, %cst_13 {dimension_numbers = #tpu.dot_dimension_numbers<[1], [0], [0], [1], [0, 0, 1, 1], [], []>} : vector<8x128xbf16>, vector<128x128xbf16>, vector<8x128xf32> -> vector<8x128xf32>
    %11 = arith.truncf %10 : vector<8x128xf32> to vector<8x128xbf16>
    %c0_14 = arith.constant 0 : index
    %c0_15 = arith.constant 0 : index
    %c0_16 = arith.constant 0 : index
    %12 = vector.load %arg6[%c0_14, %c0_15, %c0_16] : memref<1x128x128xbf16, #tpu.memory_space<vmem>>, vector<1x128x128xbf16>
    %13 = vector.shape_cast %12 : vector<1x128x128xbf16> to vector<128x128xbf16>
    %cst_17 = arith.constant dense<0.000000e+00> : vector<8x128xf32>
    %14 = tpu.matmul %3, %13, %cst_17 {dimension_numbers = #tpu.dot_dimension_numbers<[1], [0], [0], [1], [0, 0, 1, 1], [], []>} : vector<8x128xbf16>, vector<128x128xbf16>, vector<8x128xf32> -> vector<8x128xf32>
    %15 = arith.truncf %14 : vector<8x128xf32> to vector<8x128xbf16>
    %cst_18 = arith.constant 0.000000e+00 : f32
    %16 = vector.broadcast %cst_18 : f32 to vector<8x128xf32>
    %17 = vector.extract_strided_slice %7 {offsets = [0, 0], sizes = [8, 64], strides = [1, 1]} : vector<8x128xbf16> to vector<8x64xbf16>
    %18 = vector.extract_strided_slice %11 {offsets = [0, 0], sizes = [8, 64], strides = [1, 1]} : vector<8x128xbf16> to vector<8x64xbf16>
    %19 = vector.extract_strided_slice %15 {offsets = [0, 0], sizes = [8, 64], strides = [1, 1]} : vector<8x128xbf16> to vector<8x64xbf16>
    %cst_19 = arith.constant dense<0.000000e+00> : vector<8x8xf32>
    %20 = tpu.matmul %17, %18, %cst_19 {dimension_numbers = #tpu.dot_dimension_numbers<[1], [1], [0], [0], [0, 0, 1, 0], [], []>} : vector<8x64xbf16>, vector<8x64xbf16>, vector<8x8xf32> -> vector<8x8xf32>
    %cst_20 = arith.constant 1.250000e-01 : f32
    %21 = vector.broadcast %cst_20 : f32 to vector<8x8xf32>
    %22 = arith.mulf %20, %21 : vector<8x8xf32>
    %cst_21 = arith.constant dense<0xFF800000> : vector<8xf32>
    %23 = vector.multi_reduction <maximumf>, %22, %cst_21 [1] : vector<8x8xf32> to vector<8xf32>
    %24 = vector.shape_cast %23 : vector<8xf32> to vector<8x1xf32>
    %25 = vector.broadcast %24 : vector<8x1xf32> to vector<8x8xf32>
    %26 = arith.subf %22, %25 : vector<8x8xf32>
    %27 = math.exp %26 : vector<8x8xf32>
    %cst_22 = arith.constant dense<0.000000e+00> : vector<8xf32>
    %28 = vector.multi_reduction <add>, %27, %cst_22 [1] : vector<8x8xf32> to vector<8xf32>
    %29 = vector.shape_cast %28 : vector<8xf32> to vector<8x1xf32>
    %30 = tpu.reciprocal %29 {approx = true} : vector<8x1xf32> -> vector<8x1xf32>
    %31 = vector.broadcast %30 : vector<8x1xf32> to vector<8x8xf32>
    %32 = arith.mulf %27, %31 : vector<8x8xf32>
    %33 = arith.truncf %32 : vector<8x8xf32> to vector<8x8xbf16>
    %cst_23 = arith.constant dense<0.000000e+00> : vector<8x64xf32>
    %34 = tpu.matmul %33, %19, %cst_23 {dimension_numbers = #tpu.dot_dimension_numbers<[1], [0], [0], [1], [0, 0, 1, 1], [], []>} : vector<8x8xbf16>, vector<8x64xbf16>, vector<8x64xf32> -> vector<8x64xf32>
    %35 = arith.truncf %34 : vector<8x64xf32> to vector<8x64xbf16>
    %c0_24 = arith.constant 0 : index
    %c0_25 = arith.constant 0 : index
    %c0_26 = arith.constant 0 : index
    %36 = vector.load %arg7[%c0_24, %c0_25, %c0_26] : memref<1x128x128xbf16, #tpu.memory_space<vmem>>, vector<1x64x128xbf16>
    %37 = vector.shape_cast %36 : vector<1x64x128xbf16> to vector<64x128xbf16>
    %cst_27 = arith.constant dense<0.000000e+00> : vector<8x128xf32>
    %38 = tpu.matmul %35, %37, %cst_27 {dimension_numbers = #tpu.dot_dimension_numbers<[1], [0], [0], [1], [0, 0, 1, 1], [], []>} : vector<8x64xbf16>, vector<64x128xbf16>, vector<8x128xf32> -> vector<8x128xf32>
    %39 = arith.addf %16, %38 : vector<8x128xf32>
    %40 = vector.extract_strided_slice %7 {offsets = [0, 64], sizes = [8, 64], strides = [1, 1]} : vector<8x128xbf16> to vector<8x64xbf16>
    %41 = vector.extract_strided_slice %11 {offsets = [0, 64], sizes = [8, 64], strides = [1, 1]} : vector<8x128xbf16> to vector<8x64xbf16>
    %42 = vector.extract_strided_slice %15 {offsets = [0, 64], sizes = [8, 64], strides = [1, 1]} : vector<8x128xbf16> to vector<8x64xbf16>
    %cst_28 = arith.constant dense<0.000000e+00> : vector<8x8xf32>
    %43 = tpu.matmul %40, %41, %cst_28 {dimension_numbers = #tpu.dot_dimension_numbers<[1], [1], [0], [0], [0, 0, 1, 0], [], []>} : vector<8x64xbf16>, vector<8x64xbf16>, vector<8x8xf32> -> vector<8x8xf32>
    %cst_29 = arith.constant 1.250000e-01 : f32
    %44 = vector.broadcast %cst_29 : f32 to vector<8x8xf32>
    %45 = arith.mulf %43, %44 : vector<8x8xf32>
    %cst_30 = arith.constant dense<0xFF800000> : vector<8xf32>
    %46 = vector.multi_reduction <maximumf>, %45, %cst_30 [1] : vector<8x8xf32> to vector<8xf32>
    %47 = vector.shape_cast %46 : vector<8xf32> to vector<8x1xf32>
    %48 = vector.broadcast %47 : vector<8x1xf32> to vector<8x8xf32>
    %49 = arith.subf %45, %48 : vector<8x8xf32>
    %50 = math.exp %49 : vector<8x8xf32>
    %cst_31 = arith.constant dense<0.000000e+00> : vector<8xf32>
    %51 = vector.multi_reduction <add>, %50, %cst_31 [1] : vector<8x8xf32> to vector<8xf32>
    %52 = vector.shape_cast %51 : vector<8xf32> to vector<8x1xf32>
    %53 = tpu.reciprocal %52 {approx = true} : vector<8x1xf32> -> vector<8x1xf32>
    %54 = vector.broadcast %53 : vector<8x1xf32> to vector<8x8xf32>
    %55 = arith.mulf %50, %54 : vector<8x8xf32>
    %56 = arith.truncf %55 : vector<8x8xf32> to vector<8x8xbf16>
    %cst_32 = arith.constant dense<0.000000e+00> : vector<8x64xf32>
    %57 = tpu.matmul %56, %42, %cst_32 {dimension_numbers = #tpu.dot_dimension_numbers<[1], [0], [0], [1], [0, 0, 1, 1], [], []>} : vector<8x8xbf16>, vector<8x64xbf16>, vector<8x64xf32> -> vector<8x64xf32>
    %58 = arith.truncf %57 : vector<8x64xf32> to vector<8x64xbf16>
    %c0_33 = arith.constant 0 : index
    %c64 = arith.constant 64 : index
    %c0_34 = arith.constant 0 : index
    %59 = vector.load %arg7[%c0_33, %c64, %c0_34] : memref<1x128x128xbf16, #tpu.memory_space<vmem>>, vector<1x64x128xbf16>
    %60 = vector.shape_cast %59 : vector<1x64x128xbf16> to vector<64x128xbf16>
    %cst_35 = arith.constant dense<0.000000e+00> : vector<8x128xf32>
    %61 = tpu.matmul %58, %60, %cst_35 {dimension_numbers = #tpu.dot_dimension_numbers<[1], [0], [0], [1], [0, 0, 1, 1], [], []>} : vector<8x64xbf16>, vector<64x128xbf16>, vector<8x128xf32> -> vector<8x128xf32>
    %62 = arith.addf %39, %61 : vector<8x128xf32>
    %c0_36 = arith.constant 0 : index
    %c0_37 = arith.constant 0 : index
    %c0_38 = arith.constant 0 : index
    %63 = vector.load %arg8[%c0_36, %c0_37, %c0_38] : memref<1x1x128xf32, #tpu.memory_space<vmem>>, vector<1x1x128xf32>
    %64 = vector.shape_cast %63 : vector<1x1x128xf32> to vector<1x128xf32>
    %65 = vector.broadcast %64 : vector<1x128xf32> to vector<8x128xf32>
    %66 = arith.addf %62, %65 : vector<8x128xf32>
    %c0_39 = arith.constant 0 : index
    %c0_40 = arith.constant 0 : index
    %c0_41 = arith.constant 0 : index
    %c0_42 = arith.constant 0 : index
    %67 = vector.load %arg9[%c0_39, %c0_40, %c0_41, %c0_42] : memref<1x1x8x128xf32, #tpu.memory_space<vmem>>, vector<1x1x8x128xf32>
    %68 = vector.shape_cast %67 : vector<1x1x8x128xf32> to vector<8x128xf32>
    %69 = vector.shape_cast %66 : vector<8x128xf32> to vector<1x1x8x128xf32>
    tpu.vector_store %arg9[%c0_39, %c0_40, %c0_41, %c0_42], %69 {strides = array<i32>} : memref<1x1x8x128xf32, #tpu.memory_space<vmem>>, vector<1x1x8x128xf32>,
    return
  }
  func.func @transform_0(%arg0: i32, %arg1: i32) -> (i32, i32, i32, i32) {
    %c1_i32 = arith.constant 1 : i32
    %0 = arith.subi %c1_i32, %arg0 : i32
    %c0_i32 = arith.constant 0 : i32
    %c0_i32_0 = arith.constant 0 : i32
    %c0_i32_1 = arith.constant 0 : i32
    return %0, %arg1, %c0_i32, %c0_i32_0 : i32, i32, i32, i32
  }
  func.func @transform_1(%arg0: i32, %arg1: i32) -> (i32, i32, i32, i32) {
    %c0_i32 = arith.constant 0 : i32
    %c0_i32_0 = arith.constant 0 : i32
    %c0_i32_1 = arith.constant 0 : i32
    return %arg0, %arg1, %c0_i32, %c0_i32_0 : i32, i32, i32, i32
  }
  func.func @transform_2(%arg0: i32, %arg1: i32) -> (i32, i32, i32) {
    %c1_i32 = arith.constant 1 : i32
    %0 = arith.subi %c1_i32, %arg0 : i32
    %c0_i32 = arith.constant 0 : i32
    %c0_i32_0 = arith.constant 0 : i32
    %c0_i32_1 = arith.constant 0 : i32
    return %0, %c0_i32, %c0_i32_0 : i32, i32, i32
  }
  func.func @transform_3(%arg0: i32, %arg1: i32) -> (i32, i32, i32) {
    %c0_i32 = arith.constant 0 : i32
    %c0_i32_0 = arith.constant 0 : i32
    %c0_i32_1 = arith.constant 0 : i32
    return %arg0, %c0_i32, %c0_i32_0 : i32, i32, i32
  }
  func.func @transform_4(%arg0: i32, %arg1: i32) -> (i32, i32, i32) {
    %c0_i32 = arith.constant 0 : i32
    %c0_i32_0 = arith.constant 0 : i32
    %c0_i32_1 = arith.constant 0 : i32
    return %arg0, %c0_i32, %c0_i32_0 : i32, i32, i32
  }
  func.func @transform_5(%arg0: i32, %arg1: i32) -> (i32, i32, i32) {
    %c0_i32 = arith.constant 0 : i32
    %c0_i32_0 = arith.constant 0 : i32
    %c0_i32_1 = arith.constant 0 : i32
    return %arg0, %c0_i32, %c0_i32_0 : i32, i32, i32
  }
  func.func @transform_6(%arg0: i32, %arg1: i32) -> (i32, i32, i32) {
    %c0_i32 = arith.constant 0 : i32
    %c0_i32_0 = arith.constant 0 : i32
    %c0_i32_1 = arith.constant 0 : i32
    return %arg0, %c0_i32, %c0_i32_0 : i32, i32, i32
  }
  func.func @transform_7(%arg0: i32, %arg1: i32) -> (i32, i32, i32, i32) {
    %c0_i32 = arith.constant 0 : i32
    %c0_i32_0 = arith.constant 0 : i32
    %c0_i32_1 = arith.constant 0 : i32
    return %arg0, %arg1, %c0_i32, %c0_i32_0 : i32, i32, i32, i32
  }
}

</mosaic_0001>

<llo_original>
// kernel: cross_attention.1
$region0: #{cross_attention.1}
  #allocation0 [shape = 'u32[]', space=smem, size = 0x4, offset = 0x4, fixed_abs, tag = 'smem constant byte address 0x4 - core index']
  #allocation1 [shape = 'u32[144,128]{1,0:T(1,128)}', space=vmem, size = 0x12000, scoped, tag = 'internal scratch']
  %s0 = inlined_call_operand.vmem [shape: bf16[2,2,8,128], index: 0, kind: input, shape index: {}, may-alias: {0,1}]
  %s1 = inlined_call_operand.vmem [shape: bf16[2,2,8,128], index: 1, kind: input, shape index: {}, may-alias: {0,1}]
  %s2 = inlined_call_operand.vmem [shape: bf16[2,128,128], index: 2, kind: input, shape index: {}]
  %s3 = inlined_call_operand.vmem [shape: bf16[2,128,128], index: 3, kind: input, shape index: {}]
  %s4 = inlined_call_operand.vmem [shape: bf16[2,128,128], index: 4, kind: input, shape index: {}]
  %s5 = inlined_call_operand.vmem [shape: bf16[2,128,128], index: 5, kind: input, shape index: {}]
  %s6 = inlined_call_operand.vmem [shape: f32[2,1,128], index: 6, kind: input, shape index: {}]
  %s7 = inlined_call_operand.vmem [shape: f32[2,2,8,128], index: 7, kind: output, shape index: {}]
  %s8 = sld [smem:[#allocation0]]
  $region61: #{cross_attention.1} parent=0
    _
  %s10 = ssub.s32 1, %s8
  %s11 = scalar_select 0, %s10, %s8
  loop: start=0, step=1, limit=6
  $region2: #{cross_attention.1} parent=0 // loop_pre_header
    _
  $region3: #{cross_attention.1} parent=0 // loop_header
    %s13 = sphi 0, %s17
    %p14 = scmp.ge.s32.totalorder %s13, 6
    %s20 = sphi 0, %s32
    %s21 = sphi 0, %s28
    %s22 = sphi 0, %s20
    %s23 = sphi 0, %s21
    %s24 = sphi 0, %s22
    %s25 = sphi 0, %s23
    %s39 = sphi 0, %s41
    %s42 = sphi 0, %s39
    %s43 = sphi 0, %s42
    %s59 = sphi 0, %s43
    %s67 = sphi 0, %s69
    %s70 = sphi 0, %s67
    %s71 = sphi 0, %s70
    %s87 = sphi 0, %s71
    %s95 = sphi 0, %s97
    %s98 = sphi 0, %s95
    %s99 = sphi 0, %s98
    %s115 = sphi 0, %s99
    %s121 = sphi 0, %s123
    %s124 = sphi 0, %s121
    %s125 = sphi 0, %s124
    %s141 = sphi 0, %s125
    %s147 = sphi 0, %s149
    %s150 = sphi 0, %s147
    %s151 = sphi 0, %s150
    %s167 = sphi 0, %s151
    %s173 = sphi 0, %s175
    %s176 = sphi 0, %s173
    %s177 = sphi 0, %s176
    %s193 = sphi 0, %s177
    %s199 = sphi 0, %s201
    %s202 = sphi 0, %s199
    %s203 = sphi 0, %s202
    %s219 = sphi 0, %s203
    %s227 = sphi 0, %s229
    %s230 = sphi 0, %s227
    %s231 = sphi 0, %s230
    %s247 = sphi 0, %s231
  $region4: #{cross_attention.1} parent=0 // loop_header_branch
    %16 = sbr.rel (%p14) target = $region8
  $region5: #{cross_attention.1} parent=0 // loop_body
    %s18 = ssub.s32 %s13, 1
    %s19 = ssub.s32 %s13, 2
    %s26 = sadd.s32 1, %s21
    %p27 = scmp.ge.s32.totalorder %s26, 2
    %s28 = scalar_select %p27, 0, %s26
    %s29 = sadd.s32 1, %s20
    %s30 = scalar_select %p27, %s29, %s20
    %p31 = scmp.ge.s32.totalorder %s30, 2
    %s32 = scalar_select %p31, 0, %s30
    %s33 = ssub.s32 1, %s20
    %s34 = ssub.s32 1, %s32
    %s35 = ssub.s32 %s33, %s34
    %s36 = ssub.s32 %s21, %s28
    %s37 = sor.u32 %s35, %s36
    %p38 = scmp.eq.s32.totalorder %s37, 0
    %s40 = sadd.s32 %s39, 1
    %s41 = scalar_select %p38, %s39, %s40
    %p44 = pneg %p38
    %p45 = scmp.eq.s32.totalorder %s13, 3
    %p46 = por %p44, %p45
    %p47 = scmp.ne.s32.totalorder %s39, %s42
    %p48 = scmp.eq.s32.totalorder %s13, 0
    %p49 = por %p47, %p48
    %p50 = scmp.ne.s32.totalorder %s39, %s42
    %p51 = scmp.eq.s32.totalorder %s18, 3
    %p52 = por %p50, %p51
    %p53 = scmp.ne.s32.totalorder %s42, %s43
    %p54 = scmp.eq.s32.totalorder %s18, 0
    %p55 = por %p53, %p54
    %p56 = scmp.ne.s32.totalorder %s42, %s43
    %p57 = scmp.eq.s32.totalorder %s19, 3
    %p58 = por %p56, %p57
    %p60 = scmp.ne.s32.totalorder %s43, %s59
    %p61 = scmp.eq.s32.totalorder %s19, 0
    %p62 = por %p60, %p61
    %s63 = ssub.s32 %s20, %s32
    %s64 = ssub.s32 %s21, %s28
    %s65 = sor.u32 %s63, %s64
    %p66 = scmp.eq.s32.totalorder %s65, 0
    %s68 = sadd.s32 %s67, 1
    %s69 = scalar_select %p66, %s67, %s68
    %p72 = pneg %p66
    %p73 = scmp.eq.s32.totalorder %s13, 3
    %p74 = por %p72, %p73
    %p75 = scmp.ne.s32.totalorder %s67, %s70
    %p76 = scmp.eq.s32.totalorder %s13, 0
    %p77 = por %p75, %p76
    %p78 = scmp.ne.s32.totalorder %s67, %s70
    %p79 = scmp.eq.s32.totalorder %s18, 3
    %p80 = por %p78, %p79
    %p81 = scmp.ne.s32.totalorder %s70, %s71
    %p82 = scmp.eq.s32.totalorder %s18, 0
    %p83 = por %p81, %p82
    %p84 = scmp.ne.s32.totalorder %s70, %s71
    %p85 = scmp.eq.s32.totalorder %s19, 3
    %p86 = por %p84, %p85
    %p88 = scmp.ne.s32.totalorder %s71, %s87
    %p89 = scmp.eq.s32.totalorder %s19, 0
    %p90 = por %p88, %p89
    %s91 = ssub.s32 1, %s20
    %s92 = ssub.s32 1, %s32
    %s93 = ssub.s32 %s91, %s92
    %p94 = scmp.eq.s32.totalorder %s93, 0
    %s96 = sadd.s32 %s95, 1
    %s97 = scalar_select %p94, %s95, %s96
    %p100 = pneg %p94
    %p101 = scmp.eq.s32.totalorder %s13, 3
    %p102 = por %p100, %p101
    %p103 = scmp.ne.s32.totalorder %s95, %s98
    %p104 = scmp.eq.s32.totalorder %s13, 0
    %p105 = por %p103, %p104
    %p106 = scmp.ne.s32.totalorder %s95, %s98
    %p107 = scmp.eq.s32.totalorder %s18, 3
    %p108 = por %p106, %p107
    %p109 = scmp.ne.s32.totalorder %s98, %s99
    %p110 = scmp.eq.s32.totalorder %s18, 0
    %p111 = por %p109, %p110
    %p112 = scmp.ne.s32.totalorder %s98, %s99
    %p113 = scmp.eq.s32.totalorder %s19, 3
    %p114 = por %p112, %p113
    %p116 = scmp.ne.s32.totalorder %s99, %s115
    %p117 = scmp.eq.s32.totalorder %s19, 0
    %p118 = por %p116, %p117
    %s119 = ssub.s32 %s20, %s32
    %p120 = scmp.eq.s32.totalorder %s119, 0
    %s122 = sadd.s32 %s121, 1
    %s123 = scalar_select %p120, %s121, %s122
    %p126 = pneg %p120
    %p127 = scmp.eq.s32.totalorder %s13, 3
    %p128 = por %p126, %p127
    %p129 = scmp.ne.s32.totalorder %s121, %s124
    %p130 = scmp.eq.s32.totalorder %s13, 0
    %p131 = por %p129, %p130
    %p132 = scmp.ne.s32.totalorder %s121, %s124
    %p133 = scmp.eq.s32.totalorder %s18, 3
    %p134 = por %p132, %p133
    %p135 = scmp.ne.s32.totalorder %s124, %s125
    %p136 = scmp.eq.s32.totalorder %s18, 0
    %p137 = por %p135, %p136
    %p138 = scmp.ne.s32.totalorder %s124, %s125
    %p139 = scmp.eq.s32.totalorder %s19, 3
    %p140 = por %p138, %p139
    %p142 = scmp.ne.s32.totalorder %s125, %s141
    %p143 = scmp.eq.s32.totalorder %s19, 0
    %p144 = por %p142, %p143
    %s145 = ssub.s32 %s20, %s32
    %p146 = scmp.eq.s32.totalorder %s145, 0
    %s148 = sadd.s32 %s147, 1
    %s149 = scalar_select %p146, %s147, %s148
    %p152 = pneg %p146
    %p153 = scmp.eq.s32.totalorder %s13, 3
    %p154 = por %p152, %p153
    %p155 = scmp.ne.s32.totalorder %s147, %s150
    %p156 = scmp.eq.s32.totalorder %s13, 0
    %p157 = por %p155, %p156
    %p158 = scmp.ne.s32.totalorder %s147, %s150
    %p159 = scmp.eq.s32.totalorder %s18, 3
    %p160 = por %p158, %p159
    %p161 = scmp.ne.s32.totalorder %s150, %s151
    %p162 = scmp.eq.s32.totalorder %s18, 0
    %p163 = por %p161, %p162
    %p164 = scmp.ne.s32.totalorder %s150, %s151
    %p165 = scmp.eq.s32.totalorder %s19, 3
    %p166 = por %p164, %p165
    %p168 = scmp.ne.s32.totalorder %s151, %s167
    %p169 = scmp.eq.s32.totalorder %s19, 0
    %p170 = por %p168, %p169
    %s171 = ssub.s32 %s20, %s32
    %p172 = scmp.eq.s32.totalorder %s171, 0
    %s174 = sadd.s32 %s173, 1
    %s175 = scalar_select %p172, %s173, %s174
    %p178 = pneg %p172
    %p179 = scmp.eq.s32.totalorder %s13, 3
    %p180 = por %p178, %p179
    %p181 = scmp.ne.s32.totalorder %s173, %s176
    %p182 = scmp.eq.s32.totalorder %s13, 0
    %p183 = por %p181, %p182
    %p184 = scmp.ne.s32.totalorder %s173, %s176
    %p185 = scmp.eq.s32.totalorder %s18, 3
    %p186 = por %p184, %p185
    %p187 = scmp.ne.s32.totalorder %s176, %s177
    %p188 = scmp.eq.s32.totalorder %s18, 0
    %p189 = por %p187, %p188
    %p190 = scmp.ne.s32.totalorder %s176, %s177
    %p191 = scmp.eq.s32.totalorder %s19, 3
    %p192 = por %p190, %p191
    %p194 = scmp.ne.s32.totalorder %s177, %s193
    %p195 = scmp.eq.s32.totalorder %s19, 0
    %p196 = por %p194, %p195
    %s197 = ssub.s32 %s20, %s32
    %p198 = scmp.eq.s32.totalorder %s197, 0
    %s200 = sadd.s32 %s199, 1
    %s201 = scalar_select %p198, %s199, %s200
    %p204 = pneg %p198
    %p205 = scmp.eq.s32.totalorder %s13, 3
    %p206 = por %p204, %p205
    %p207 = scmp.ne.s32.totalorder %s199, %s202
    %p208 = scmp.eq.s32.totalorder %s13, 0
    %p209 = por %p207, %p208
    %p210 = scmp.ne.s32.totalorder %s199, %s202
    %p211 = scmp.eq.s32.totalorder %s18, 3
    %p212 = por %p210, %p211
    %p213 = scmp.ne.s32.totalorder %s202, %s203
    %p214 = scmp.eq.s32.totalorder %s18, 0
    %p215 = por %p213, %p214
    %p216 = scmp.ne.s32.totalorder %s202, %s203
    %p217 = scmp.eq.s32.totalorder %s19, 3
    %p218 = por %p216, %p217
    %p220 = scmp.ne.s32.totalorder %s203, %s219
    %p221 = scmp.eq.s32.totalorder %s19, 0
    %p222 = por %p220, %p221
    %s223 = ssub.s32 %s20, %s32
    %s224 = ssub.s32 %s21, %s28
    %s225 = sor.u32 %s223, %s224
    %p226 = scmp.eq.s32.totalorder %s225, 0
    %s228 = sadd.s32 %s227, 1
    %s229 = scalar_select %p226, %s227, %s228
    %p232 = pneg %p226
    %p233 = scmp.eq.s32.totalorder %s13, 3
    %p234 = por %p232, %p233
    %p235 = scmp.ne.s32.totalorder %s227, %s230
    %p236 = scmp.eq.s32.totalorder %s13, 0
    %p237 = por %p235, %p236
    %p238 = scmp.ne.s32.totalorder %s227, %s230
    %p239 = scmp.eq.s32.totalorder %s18, 3
    %p240 = por %p238, %p239
    %p241 = scmp.ne.s32.totalorder %s230, %s231
    %p242 = scmp.eq.s32.totalorder %s18, 0
    %p243 = por %p241, %p242
    %p244 = scmp.ne.s32.totalorder %s230, %s231
    %p245 = scmp.eq.s32.totalorder %s19, 3
    %p246 = por %p244, %p245
    %p248 = scmp.ne.s32.totalorder %s231, %s247
    %p249 = scmp.eq.s32.totalorder %s19, 0
    %p250 = por %p248, %p249
    %p251 = scmp.le.s32.totalorder 1, %s13
    %p252 = scmp.lt.s32.totalorder %s13, 5
    %p253 = pnand %p251, %p252
    %p254 = pneg %p253
    // Predicated region
    $region9: #{cross_attention.1} parent=5 // pred_check
      _
    $region10: #{cross_attention.1} parent=5 // pred_check_branch
      %256 = sbr.rel (%p253) target = $region12
    $region11: #{cross_attention.1} parent=5 // pred_region
      %s257 = ssub.s32 %s13, 1
    $region12: #{cross_attention.1} parent=5 // pred_fallthru
      _
    %p258 = scmp.lt.s32.totalorder %s13, 4
    // Predicated region
    $region13: #{cross_attention.1} parent=5 // pred_check
      %p259 = pneg %p258
    $region14: #{cross_attention.1} parent=5 // pred_check_branch
      %261 = sbr.rel (%p259) target = $region16
    $region15: #{cross_attention.1} parent=5 // pred_region
      // Predicated region
      $region17: #{cross_attention.1} parent=15 // pred_check
        %p262 = pneg %p49
      $region18: #{cross_attention.1} parent=15 // pred_check_branch
        %264 = sbr.rel (%p262) target = $region20
      $region19: #{cross_attention.1} parent=15 // pred_region
        %s265 = ssub.s32 1, %s20
        %p266 = scmp.lt.s32.totalorder %s265, 1
        %s267 = scalar_select %p266, %s265, 1
        %p268 = scmp.lt.s32.totalorder %s21, 1
        %s269 = scalar_select %p268, %s21, 1
        %s270 = smul.addr %s267, 2
        %s271 = sadd.s32 %s269, %s270
        %s272 = smul.addr %s271, 4
        %s273 = scalar_lea.vmem %s0, %s272
        %s274 = ssub.s32 1, %s20
      $region20: #{cross_attention.1} parent=15 // pred_fallthru
        _
      // Predicated region
      $region21: #{cross_attention.1} parent=15 // pred_check
        %p275 = pneg %p77
      $region22: #{cross_attention.1} parent=15 // pred_check_branch
        %277 = sbr.rel (%p275) target = $region24
      $region23: #{cross_attention.1} parent=15 // pred_region
        %p278 = scmp.lt.s32.totalorder %s20, 1
        %s279 = scalar_select %p278, %s20, 1
        %p280 = scmp.lt.s32.totalorder %s21, 1
        %s281 = scalar_select %p280, %s21, 1
        %s282 = smul.addr %s279, 2
        %s283 = sadd.s32 %s281, %s282
        %s284 = smul.addr %s283, 4
        %s285 = scalar_lea.vmem %s1, %s284
      $region24: #{cross_attention.1} parent=15 // pred_fallthru
        _
      // Predicated region
      $region25: #{cross_attention.1} parent=15 // pred_check
        %p286 = pneg %p105
      $region26: #{cross_attention.1} parent=15 // pred_check_branch
        %288 = sbr.rel (%p286) target = $region28
      $region27: #{cross_attention.1} parent=15 // pred_region
        %s289 = ssub.s32 1, %s20
        %p290 = scmp.lt.s32.totalorder %s289, 1
        %s291 = scalar_select %p290, %s289, 1
        %s292 = smul.addr %s291, 16
        %s293 = smul.addr %s292, 4
        %s294 = scalar_lea.vmem %s2, %s293
        %s295 = ssub.s32 1, %s20
      $region28: #{cross_attention.1} parent=15 // pred_fallthru
        _
      // Predicated region
      $region29: #{cross_attention.1} parent=15 // pred_check
        %p296 = pneg %p131
      $region30: #{cross_attention.1} parent=15 // pred_check_branch
        %298 = sbr.rel (%p296) target = $region32
      $region31: #{cross_attention.1} parent=15 // pred_region
        %p299 = scmp.lt.s32.totalorder %s20, 1
        %s300 = scalar_select %p299, %s20, 1
        %s301 = smul.addr %s300, 16
        %s302 = smul.addr %s301, 4
        %s303 = scalar_lea.vmem %s3, %s302
      $region32: #{cross_attention.1} parent=15 // pred_fallthru
        _
      // Predicated region
      $region33: #{cross_attention.1} parent=15 // pred_check
        %p304 = pneg %p157
      $region34: #{cross_attention.1} parent=15 // pred_check_branch
        %306 = sbr.rel (%p304) target = $region36
      $region35: #{cross_attention.1} parent=15 // pred_region
        %p307 = scmp.lt.s32.totalorder %s20, 1
        %s308 = scalar_select %p307, %s20, 1
        %s309 = smul.addr %s308, 16
        %s310 = smul.addr %s309, 4
        %s311 = scalar_lea.vmem %s4, %s310
      $region36: #{cross_attention.1} parent=15 // pred_fallthru
        _
      // Predicated region
      $region37: #{cross_attention.1} parent=15 // pred_check
        %p312 = pneg %p183
      $region38: #{cross_attention.1} parent=15 // pred_check_branch
        %314 = sbr.rel (%p312) target = $region40
      $region39: #{cross_attention.1} parent=15 // pred_region
        %p315 = scmp.lt.s32.totalorder %s20, 1
        %s316 = scalar_select %p315, %s20, 1
        %s317 = smul.addr %s316, 16
        %s318 = smul.addr %s317, 4
        %s319 = scalar_lea.vmem %s5, %s318
      $region40: #{cross_attention.1} parent=15 // pred_fallthru
        _
      // Predicated region
      $region41: #{cross_attention.1} parent=15 // pred_check
        %p320 = pneg %p209
      $region42: #{cross_attention.1} parent=15 // pred_check_branch
        %322 = sbr.rel (%p320) target = $region44
      $region43: #{cross_attention.1} parent=15 // pred_region
        %p323 = scmp.lt.s32.totalorder %s20, 1
        %s324 = scalar_select %p323, %s20, 1
        %s325 = scalar_lea.vmem %s6, %s324
      $region44: #{cross_attention.1} parent=15 // pred_fallthru
        _
    $region16: #{cross_attention.1} parent=5 // pred_fallthru
      _
    %p326 = scmp.le.s32.totalorder 1, %s13
    %p327 = scmp.lt.s32.totalorder %s13, 5
    %p328 = pnand %p326, %p327
    %p329 = pneg %p328
    // Predicated region
    $region45: #{cross_attention.1} parent=5 // pred_check
      _
    $region46: #{cross_attention.1} parent=5 // pred_check_branch
      %331 = sbr.rel (%p328) target = $region48
    $region47: #{cross_attention.1} parent=5 // pred_region
      %s332 = ssub.s32 %s13, 1
      %s333 = ssub.s32 1, %s22
      %p334 = scmp.lt.s32.totalorder %s333, 1
      %s335 = scalar_select %p334, %s333, 1
      %p336 = scmp.lt.s32.totalorder %s23, 1
      %s337 = scalar_select %p336, %s23, 1
      %s338 = smul.addr %s335, 2
      %s339 = sadd.s32 %s337, %s338
      %s340 = smul.addr %s339, 4
      %s341 = scalar_lea.vmem %s0, %s340
      %p342 = pneg %p55
      %p343 = pneg %p52
      %p344 = scmp.lt.s32.totalorder %s22, 1
      %s345 = scalar_select %p344, %s22, 1
      %p346 = scmp.lt.s32.totalorder %s23, 1
      %s347 = scalar_select %p346, %s23, 1
      %s348 = smul.addr %s345, 2
      %s349 = sadd.s32 %s347, %s348
      %s350 = smul.addr %s349, 4
      %s351 = scalar_lea.vmem %s1, %s350
      %p352 = pneg %p83
      %p353 = pneg %p80
      %s354 = ssub.s32 1, %s22
      %p355 = scmp.lt.s32.totalorder %s354, 1
      %s356 = scalar_select %p355, %s354, 1
      %s357 = smul.addr %s356, 16
      %s358 = smul.addr %s357, 4
      %s359 = scalar_lea.vmem %s2, %s358
      %p360 = pneg %p111
      %p361 = pneg %p108
      %p362 = scmp.lt.s32.totalorder %s22, 1
      %s363 = scalar_select %p362, %s22, 1
      %s364 = smul.addr %s363, 16
      %s365 = smul.addr %s364, 4
      %s366 = scalar_lea.vmem %s3, %s365
      %p367 = pneg %p137
      %p368 = pneg %p134
      %p369 = scmp.lt.s32.totalorder %s22, 1
      %s370 = scalar_select %p369, %s22, 1
      %s371 = smul.addr %s370, 16
      %s372 = smul.addr %s371, 4
      %s373 = scalar_lea.vmem %s4, %s372
      %p374 = pneg %p163
      %p375 = pneg %p160
      %p376 = scmp.lt.s32.totalorder %s22, 1
      %s377 = scalar_select %p376, %s22, 1
      %s378 = smul.addr %s377, 16
      %s379 = smul.addr %s378, 4
      %s380 = scalar_lea.vmem %s5, %s379
      %p381 = pneg %p189
      %p382 = pneg %p186
      %p383 = scmp.lt.s32.totalorder %s22, 1
      %s384 = scalar_select %p383, %s22, 1
      %s385 = scalar_lea.vmem %s6, %s384
      %p386 = pneg %p215
      %p387 = pneg %p212
      %p388 = pneg %p243
      %p389 = pneg %p240
      %p390 = scmp.lt.s32.totalorder %s22, 1
      %s391 = scalar_select %p390, %s22, 1
      %p392 = scmp.lt.s32.totalorder %s23, 1
      %s393 = scalar_select %p392, %s23, 1
      %s394 = smul.addr %s391, 2
      %s395 = sadd.s32 %s393, %s394
      %s396 = smul.addr %s395, 8
      %s397 = scalar_lea.vmem %s7, %s396
      %s398 = ssub.s32 1, %s22
      %p399 = scmp.lt.s32.totalorder %s398, 1
      %s400 = scalar_select %p399, %s398, 1
      %p401 = scmp.lt.s32.totalorder %s23, 1
      %s402 = scalar_select %p401, %s23, 1
      %s403 = smul.addr %s400, 2
      %s404 = sadd.s32 %s402, %s403
      %s405 = smul.addr %s404, 4
      %s406 = scalar_lea.vmem %s0, %s405
      %s407 = ssub.s32 1, %s22
      %p408 = scmp.lt.s32.totalorder %s22, 1
      %s409 = scalar_select %p408, %s22, 1
      %p410 = scmp.lt.s32.totalorder %s23, 1
      %s411 = scalar_select %p410, %s23, 1
      %s412 = smul.addr %s409, 2
      %s413 = sadd.s32 %s411, %s412
      %s414 = smul.addr %s413, 4
      %s415 = scalar_lea.vmem %s1, %s414
      %s416 = ssub.s32 1, %s22
      %p417 = scmp.lt.s32.totalorder %s416, 1
      %s418 = scalar_select %p417, %s416, 1
      %s419 = smul.addr %s418, 16
      %s420 = smul.addr %s419, 4
      %s421 = scalar_lea.vmem %s2, %s420
      %s422 = ssub.s32 1, %s22
      %p423 = scmp.lt.s32.totalorder %s22, 1
      %s424 = scalar_select %p423, %s22, 1
      %s425 = smul.addr %s424, 16
      %s426 = smul.addr %s425, 4
      %s427 = scalar_lea.vmem %s3, %s426
      %p428 = scmp.lt.s32.totalorder %s22, 1
      %s429 = scalar_select %p428, %s22, 1
      %s430 = smul.addr %s429, 16
      %s431 = smul.addr %s430, 4
      %s432 = scalar_lea.vmem %s4, %s431
      %p433 = scmp.lt.s32.totalorder %s22, 1
      %s434 = scalar_select %p433, %s22, 1
      %s435 = smul.addr %s434, 16
      %s436 = smul.addr %s435, 4
      %s437 = scalar_lea.vmem %s5, %s436
      %p438 = scmp.lt.s32.totalorder %s22, 1
      %s439 = scalar_select %p438, %s22, 1
      %s440 = scalar_lea.vmem %s6, %s439
      %p441 = scmp.lt.s32.totalorder %s22, 1
      %s442 = scalar_select %p441, %s22, 1
      %p443 = scmp.lt.s32.totalorder %s23, 1
      %s444 = scalar_select %p443, %s23, 1
      %s445 = smul.addr %s442, 2
      %s446 = sadd.s32 %s444, %s445
      %s447 = smul.addr %s446, 8
      %s448 = scalar_lea.vmem %s7, %s447
      %v450 = vld [vmem:[%s406] sm:$0xf]
      %v451 = vld [vmem:[%s415] sm:$0xf]
      %v452 = vld [vmem:[%s421] sm:$0xf]
      %v453 = vld [vmem:[%s421 + $0x4] sm:$0xf]
      %v454 = vld [vmem:[%s421 + $0x8] sm:$0xf]
      %v455 = vld [vmem:[%s421 + $0xc] sm:$0xf]
      %v456 = vld [vmem:[%s421 + $0x10] sm:$0xf]
      %v457 = vld [vmem:[%s421 + $0x14] sm:$0xf]
      %v458 = vld [vmem:[%s421 + $0x18] sm:$0xf]
      %v459 = vld [vmem:[%s421 + $0x1c] sm:$0xf]
      %v460 = vld [vmem:[%s421 + $0x20] sm:$0xf]
      %v461 = vld [vmem:[%s421 + $0x24] sm:$0xf]
      %v462 = vld [vmem:[%s421 + $0x28] sm:$0xf]
      %v463 = vld [vmem:[%s421 + $0x2c] sm:$0xf]
      %v464 = vld [vmem:[%s421 + $0x30] sm:$0xf]
      %v465 = vld [vmem:[%s421 + $0x34] sm:$0xf]
      %v466 = vld [vmem:[%s421 + $0x38] sm:$0xf]
      %v467 = vld [vmem:[%s421 + $0x3c] sm:$0xf]
      %v484 = vunpack.c.l.b16 %v452
      %v485 = vunpack.c.l.b16 %v453
      %v486 = vunpack.c.l.b16 %v454
      %v487 = vunpack.c.l.b16 %v455
      %v488 = vunpack.c.l.b16 %v456
      %v489 = vunpack.c.l.b16 %v457
      %v490 = vunpack.c.l.b16 %v458
      %v491 = vunpack.c.l.b16 %v459
      %v492 = vunpack.c.l.b16 %v460
      %v493 = vunpack.c.l.b16 %v461
      %v494 = vunpack.c.l.b16 %v462
      %v495 = vunpack.c.l.b16 %v463
      %v496 = vunpack.c.l.b16 %v464
      %v497 = vunpack.c.l.b16 %v465
      %v498 = vunpack.c.l.b16 %v466
      %v499 = vunpack.c.l.b16 %v467
      %v500 = vpack.c.b16 %v485, %v484
      %v501 = vpack.c.b16 %v487, %v486
      %v502 = vpack.c.b16 %v489, %v488
      %v503 = vpack.c.b16 %v491, %v490
      %v504 = vpack.c.b16 %v493, %v492
      %v505 = vpack.c.b16 %v495, %v494
      %v506 = vpack.c.b16 %v497, %v496
      %v507 = vpack.c.b16 %v499, %v498
      %516 = vmatprep.subr.bf16.mxu0 0
      %517 = vmatpush1.bf16.msra.mxu0 %v500
      %518 = vmatprep.subr.bf16.mxu0 0
      %519 = vmatpush1.bf16.msra.mxu0 %v501
      %520 = vmatprep.subr.bf16.mxu0 0
      %521 = vmatpush1.bf16.msra.mxu0 %v502
      %522 = vmatprep.subr.bf16.mxu0 0
      %523 = vmatpush1.bf16.msra.mxu0 %v503
      %524 = vmatprep.subr.bf16.mxu0 0
      %525 = vmatpush1.bf16.msra.mxu0 %v504
      %526 = vmatprep.subr.bf16.mxu0 0
      %527 = vmatpush1.bf16.msra.mxu0 %v505
      %528 = vmatprep.subr.bf16.mxu0 0
      %529 = vmatpush1.bf16.msra.mxu0 %v506
      %530 = vmatprep.subr.bf16.mxu0 0
      %531 = vmatpush1.bf16.msra.mxu0 %v507
      %532 = vmatprep.subr.bf16.mxu0 0
      %533 = vmatpush1.bf16.msra.mxu0 0
      %534 = vmatprep.subr.bf16.mxu0 0
      %535 = vmatpush1.bf16.msra.mxu0 0
      %536 = vmatprep.subr.bf16.mxu0 0
      %537 = vmatpush1.bf16.msra.mxu0 0
      %538 = vmatprep.subr.bf16.mxu0 0
      %539 = vmatpush1.bf16.msra.mxu0 0
      %540 = vmatprep.subr.bf16.mxu0 0
      %541 = vmatpush1.bf16.msra.mxu0 0
      %542 = vmatprep.subr.bf16.mxu0 0
      %543 = vmatpush1.bf16.msra.mxu0 0
      %544 = vmatprep.subr.bf16.mxu0 0
      %545 = vmatpush1.bf16.msra.mxu0 0
      %546 = vmatprep.subr.bf16.mxu0 0
      %547 = vmatpush1.bf16.msra.mxu0 0
      %548 = vmatprep.mubr.bf16.mxu0 0
      %549 = vmatmul.mubr.bf16.gmra.mrb[0].mxu0 %v450
      %v550 = vpop.f32.mrb[0].mxu0
      %v551 = vadd.f32 0.0, %v550
      %v552 = vpop.f32.mrb[0].mxu0
      %v553 = vpop.f32.mrb[0].mxu0
      %v554 = vpop.f32.mrb[0].mxu0
      %555 = vdwg.mxu0
      %v556 = vpack.c.bf16 %v551, %v551
      %v557 = vld [vmem:[%s427] sm:$0xf]
      %v558 = vld [vmem:[%s427 + $0x4] sm:$0xf]
      %v559 = vld [vmem:[%s427 + $0x8] sm:$0xf]
      %v560 = vld [vmem:[%s427 + $0xc] sm:$0xf]
      %v561 = vld [vmem:[%s427 + $0x10] sm:$0xf]
      %v562 = vld [vmem:[%s427 + $0x14] sm:$0xf]
      %v563 = vld [vmem:[%s427 + $0x18] sm:$0xf]
      %v564 = vld [vmem:[%s427 + $0x1c] sm:$0xf]
      %v565 = vld [vmem:[%s427 + $0x20] sm:$0xf]
      %v566 = vld [vmem:[%s427 + $0x24] sm:$0xf]
      %v567 = vld [vmem:[%s427 + $0x28] sm:$0xf]
      %v568 = vld [vmem:[%s427 + $0x2c] sm:$0xf]
      %v569 = vld [vmem:[%s427 + $0x30] sm:$0xf]
      %v570 = vld [vmem:[%s427 + $0x34] sm:$0xf]
      %v571 = vld [vmem:[%s427 + $0x38] sm:$0xf]
      %v572 = vld [vmem:[%s427 + $0x3c] sm:$0xf]
      %v589 = vunpack.c.l.b16 %v557
      %v590 = vunpack.c.l.b16 %v558
      %v591 = vunpack.c.l.b16 %v559
      %v592 = vunpack.c.l.b16 %v560
      %v593 = vunpack.c.l.b16 %v561
      %v594 = vunpack.c.l.b16 %v562
      %v595 = vunpack.c.l.b16 %v563
      %v596 = vunpack.c.l.b16 %v564
      %v597 = vunpack.c.l.b16 %v565
      %v598 = vunpack.c.l.b16 %v566
      %v599 = vunpack.c.l.b16 %v567
      %v600 = vunpack.c.l.b16 %v568
      %v601 = vunpack.c.l.b16 %v569
      %v602 = vunpack.c.l.b16 %v570
      %v603 = vunpack.c.l.b16 %v571
      %v604 = vunpack.c.l.b16 %v572
      %v605 = vpack.c.b16 %v590, %v589
      %v606 = vpack.c.b16 %v592, %v591
      %v607 = vpack.c.b16 %v594, %v593
      %v608 = vpack.c.b16 %v596, %v595
      %v609 = vpack.c.b16 %v598, %v597
      %v610 = vpack.c.b16 %v600, %v599
      %v611 = vpack.c.b16 %v602, %v601
      %v612 = vpack.c.b16 %v604, %v603
      %621 = vmatprep.subr.bf16.mxu0 0
      %622 = vmatpush1.bf16.msra.mxu0 %v605
      %623 = vmatprep.subr.bf16.mxu0 0
      %624 = vmatpush1.bf16.msra.mxu0 %v606
      %625 = vmatprep.subr.bf16.mxu0 0
      %626 = vmatpush1.bf16.msra.mxu0 %v607
      %627 = vmatprep.subr.bf16.mxu0 0
      %628 = vmatpush1.bf16.msra.mxu0 %v608
      %629 = vmatprep.subr.bf16.mxu0 0
      %630 = vmatpush1.bf16.msra.mxu0 %v609
      %631 = vmatprep.subr.bf16.mxu0 0
      %632 = vmatpush1.bf16.msra.mxu0 %v610
      %633 = vmatprep.subr.bf16.mxu0 0
      %634 = vmatpush1.bf16.msra.mxu0 %v611
      %635 = vmatprep.subr.bf16.mxu0 0
      %636 = vmatpush1.bf16.msra.mxu0 %v612
      %637 = vmatprep.subr.bf16.mxu0 0
      %638 = vmatpush1.bf16.msra.mxu0 0
      %639 = vmatprep.subr.bf16.mxu0 0
      %640 = vmatpush1.bf16.msra.mxu0 0
      %641 = vmatprep.subr.bf16.mxu0 0
      %642 = vmatpush1.bf16.msra.mxu0 0
      %643 = vmatprep.subr.bf16.mxu0 0
      %644 = vmatpush1.bf16.msra.mxu0 0
      %645 = vmatprep.subr.bf16.mxu0 0
      %646 = vmatpush1.bf16.msra.mxu0 0
      %647 = vmatprep.subr.bf16.mxu0 0
      %648 = vmatpush1.bf16.msra.mxu0 0
      %649 = vmatprep.subr.bf16.mxu0 0
      %650 = vmatpush1.bf16.msra.mxu0 0
      %651 = vmatprep.subr.bf16.mxu0 0
      %652 = vmatpush1.bf16.msra.mxu0 0
      %653 = vmatprep.mubr.bf16.mxu0 0
      %654 = vmatmul.mubr.bf16.gmra.mrb[0].mxu0 %v451
      %v655 = vpop.f32.mrb[0].mxu0
      %v656 = vadd.f32 0.0, %v655
      %v657 = vpop.f32.mrb[0].mxu0
      %v658 = vpop.f32.mrb[0].mxu0
      %v659 = vpop.f32.mrb[0].mxu0
      %660 = vdwg.mxu0
      %v661 = vpack.c.bf16 %v656, %v656
      %v662 = vld [vmem:[%s432] sm:$0xf]
      %v663 = vld [vmem:[%s432 + $0x4] sm:$0xf]
      %v664 = vld [vmem:[%s432 + $0x8] sm:$0xf]
      %v665 = vld [vmem:[%s432 + $0xc] sm:$0xf]
      %v666 = vld [vmem:[%s432 + $0x10] sm:$0xf]
      %v667 = vld [vmem:[%s432 + $0x14] sm:$0xf]
      %v668 = vld [vmem:[%s432 + $0x18] sm:$0xf]
      %v669 = vld [vmem:[%s432 + $0x1c] sm:$0xf]
      %v670 = vld [vmem:[%s432 + $0x20] sm:$0xf]
      %v671 = vld [vmem:[%s432 + $0x24] sm:$0xf]
      %v672 = vld [vmem:[%s432 + $0x28] sm:$0xf]
      %v673 = vld [vmem:[%s432 + $0x2c] sm:$0xf]
      %v674 = vld [vmem:[%s432 + $0x30] sm:$0xf]
      %v675 = vld [vmem:[%s432 + $0x34] sm:$0xf]
      %v676 = vld [vmem:[%s432 + $0x38] sm:$0xf]
      %v677 = vld [vmem:[%s432 + $0x3c] sm:$0xf]
      %v694 = vunpack.c.l.b16 %v662
      %v695 = vunpack.c.l.b16 %v663
      %v696 = vunpack.c.l.b16 %v664
      %v697 = vunpack.c.l.b16 %v665
      %v698 = vunpack.c.l.b16 %v666
      %v699 = vunpack.c.l.b16 %v667
      %v700 = vunpack.c.l.b16 %v668
      %v701 = vunpack.c.l.b16 %v669
      %v702 = vunpack.c.l.b16 %v670
      %v703 = vunpack.c.l.b16 %v671
      %v704 = vunpack.c.l.b16 %v672
      %v705 = vunpack.c.l.b16 %v673
      %v706 = vunpack.c.l.b16 %v674
      %v707 = vunpack.c.l.b16 %v675
      %v708 = vunpack.c.l.b16 %v676
      %v709 = vunpack.c.l.b16 %v677
      %v710 = vpack.c.b16 %v695, %v694
      %v711 = vpack.c.b16 %v697, %v696
      %v712 = vpack.c.b16 %v699, %v698
      %v713 = vpack.c.b16 %v701, %v700
      %v714 = vpack.c.b16 %v703, %v702
      %v715 = vpack.c.b16 %v705, %v704
      %v716 = vpack.c.b16 %v707, %v706
      %v717 = vpack.c.b16 %v709, %v708
      %726 = vmatprep.subr.bf16.mxu0 0
      %727 = vmatpush1.bf16.msra.mxu0 %v710
      %728 = vmatprep.subr.bf16.mxu0 0
      %729 = vmatpush1.bf16.msra.mxu0 %v711
      %730 = vmatprep.subr.bf16.mxu0 0
      %731 = vmatpush1.bf16.msra.mxu0 %v712
      %732 = vmatprep.subr.bf16.mxu0 0
      %733 = vmatpush1.bf16.msra.mxu0 %v713
      %734 = vmatprep.subr.bf16.mxu0 0
      %735 = vmatpush1.bf16.msra.mxu0 %v714
      %736 = vmatprep.subr.bf16.mxu0 0
      %737 = vmatpush1.bf16.msra.mxu0 %v715
      %738 = vmatprep.subr.bf16.mxu0 0
      %739 = vmatpush1.bf16.msra.mxu0 %v716
      %740 = vmatprep.subr.bf16.mxu0 0
      %741 = vmatpush1.bf16.msra.mxu0 %v717
      %742 = vmatprep.subr.bf16.mxu0 0
      %743 = vmatpush1.bf16.msra.mxu0 0
      %744 = vmatprep.subr.bf16.mxu0 0
      %745 = vmatpush1.bf16.msra.mxu0 0
      %746 = vmatprep.subr.bf16.mxu0 0
      %747 = vmatpush1.bf16.msra.mxu0 0
      %748 = vmatprep.subr.bf16.mxu0 0
      %749 = vmatpush1.bf16.msra.mxu0 0
      %750 = vmatprep.subr.bf16.mxu0 0
      %751 = vmatpush1.bf16.msra.mxu0 0
      %752 = vmatprep.subr.bf16.mxu0 0
      %753 = vmatpush1.bf16.msra.mxu0 0
      %754 = vmatprep.subr.bf16.mxu0 0
      %755 = vmatpush1.bf16.msra.mxu0 0
      %756 = vmatprep.subr.bf16.mxu0 0
      %757 = vmatpush1.bf16.msra.mxu0 0
      %758 = vmatprep.mubr.bf16.mxu0 0
      %759 = vmatmul.mubr.bf16.gmra.mrb[0].mxu0 %v451
      %v760 = vpop.f32.mrb[0].mxu0
      %v761 = vadd.f32 0.0, %v760
      %v762 = vpop.f32.mrb[0].mxu0
      %v763 = vpop.f32.mrb[0].mxu0
      %v764 = vpop.f32.mrb[0].mxu0
      %765 = vdwg.mxu0
      %v766 = vpack.c.bf16 %v761, %v761
      %vm767 = vcmask 523264
      %v769 = vsel %vm767, %v556, 0
      %v772 = vsel %vm767, %v661, 0
      %774 = vmatprep.subr.bf16.mxu0 0
      %775 = vmatpush1.bf16.xpose.msra.mxu0 %v772
      %776 = vmatprep.subr.bf16.mxu0 0
      %777 = vmatpush1.bf16.xpose.msra.mxu0 0
      %778 = vmatprep.subr.bf16.mxu0 0
      %779 = vmatpush1.bf16.xpose.msra.mxu0 0
      %780 = vmatprep.subr.bf16.mxu0 0
      %781 = vmatpush1.bf16.xpose.msra.mxu0 0
      %782 = vmatprep.subr.bf16.mxu0 0
      %783 = vmatpush1.bf16.xpose.msra.mxu0 0
      %784 = vmatprep.subr.bf16.mxu0 0
      %785 = vmatpush1.bf16.xpose.msra.mxu0 0
      %786 = vmatprep.subr.bf16.mxu0 0
      %787 = vmatpush1.bf16.xpose.msra.mxu0 0
      %788 = vmatprep.subr.bf16.mxu0 0
      %789 = vmatpush1.bf16.xpose.msra.mxu0 0
      %790 = vmatprep.subr.bf16.mxu0 0
      %791 = vmatpush1.bf16.xpose.msra.mxu0 0
      %792 = vmatprep.subr.bf16.mxu0 0
      %793 = vmatpush1.bf16.xpose.msra.mxu0 0
      %794 = vmatprep.subr.bf16.mxu0 0
      %795 = vmatpush1.bf16.xpose.msra.mxu0 0
      %796 = vmatprep.subr.bf16.mxu0 0
      %797 = vmatpush1.bf16.xpose.msra.mxu0 0
      %798 = vmatprep.subr.bf16.mxu0 0
      %799 = vmatpush1.bf16.xpose.msra.mxu0 0
      %800 = vmatprep.subr.bf16.mxu0 0
      %801 = vmatpush1.bf16.xpose.msra.mxu0 0
      %802 = vmatprep.subr.bf16.mxu0 0
      %803 = vmatpush1.bf16.xpose.msra.mxu0 0
      %804 = vmatprep.subr.bf16.mxu0 0
      %805 = vmatpush1.bf16.xpose.msra.mxu0 0
      %806 = vmatprep.mubr.bf16.mxu0 0
      %807 = vmatmul.mubr.bf16.gmra.mrb[0].mxu0 %v769
      %v808 = vpop.f32.mrb[0].mxu0
      %v809 = vadd.f32 0.0, %v808
      %v810 = vpop.f32.mrb[0].mxu0
      %v811 = vpop.f32.mrb[0].mxu0
      %v812 = vpop.f32.mrb[0].mxu0
      %813 = vdwg.mxu0
      %v814 = vmul.f32 %v809, 0.125
      %vm815 = vcmask 64512
      %v816 = vsel %vm815, %v814, -inf
      %817 = vmax.xlane.f32.xlu0 %v816
      %v818 = vpop.xlane.xlu0 %817
      %v819 = vsub.f32 %v814, %v818
      %v820 = vmul.f32 %v819, 1.442695
      %v821 = vpow.pop %v820
      %v822 = vsel %vm815, %v821, 0.0
      %823 = vadd.xlane.f32.xlu0 %v822
      %v824 = vpop.xlane.xlu0 %823
      %v825 = vrcp.pop %v824
      %v826 = vmul.f32 %v821, %v825
      %v827 = vpack.c.bf16 %v826, %v826
      %v829 = vsel %vm815, %v827, 0
      %vm831 = vcmask 1043456
      %v833 = vsel %vm831, %v766, 0
      %835 = vmatprep.subr.bf16.mxu0 0
      %836 = vmatpush1.bf16.msra.mxu0 %v833
      %837 = vmatprep.subr.bf16.mxu0 0
      %838 = vmatpush1.bf16.msra.mxu0 0
      %839 = vmatprep.subr.bf16.mxu0 0
      %840 = vmatpush1.bf16.msra.mxu0 0
      %841 = vmatprep.subr.bf16.mxu0 0
      %842 = vmatpush1.bf16.msra.mxu0 0
      %843 = vmatprep.subr.bf16.mxu0 0
      %844 = vmatpush1.bf16.msra.mxu0 0
      %845 = vmatprep.subr.bf16.mxu0 0
      %846 = vmatpush1.bf16.msra.mxu0 0
      %847 = vmatprep.subr.bf16.mxu0 0
      %848 = vmatpush1.bf16.msra.mxu0 0
      %849 = vmatprep.subr.bf16.mxu0 0
      %850 = vmatpush1.bf16.msra.mxu0 0
      %851 = vmatprep.subr.bf16.mxu0 0
      %852 = vmatpush1.bf16.msra.mxu0 0
      %853 = vmatprep.subr.bf16.mxu0 0
      %854 = vmatpush1.bf16.msra.mxu0 0
      %855 = vmatprep.subr.bf16.mxu0 0
      %856 = vmatpush1.bf16.msra.mxu0 0
      %857 = vmatprep.subr.bf16.mxu0 0
      %858 = vmatpush1.bf16.msra.mxu0 0
      %859 = vmatprep.subr.bf16.mxu0 0
      %860 = vmatpush1.bf16.msra.mxu0 0
      %861 = vmatprep.subr.bf16.mxu0 0
      %862 = vmatpush1.bf16.msra.mxu0 0
      %863 = vmatprep.subr.bf16.mxu0 0
      %864 = vmatpush1.bf16.msra.mxu0 0
      %865 = vmatprep.subr.bf16.mxu0 0
      %866 = vmatpush1.bf16.msra.mxu0 0
      %867 = vmatprep.mubr.bf16.mxu0 0
      %868 = vmatmul.mubr.bf16.gmra.mrb[0].mxu0 %v829
      %v869 = vpop.f32.mrb[0].mxu0
      %v870 = vadd.f32 0.0, %v869
      %v871 = vpop.f32.mrb[0].mxu0
      %v872 = vpop.f32.mrb[0].mxu0
      %v873 = vpop.f32.mrb[0].mxu0
      %874 = vdwg.mxu0
      %v875 = vpack.c.bf16 %v870, %v870
      %v876 = vld [vmem:[%s437] sm:$0xf]
      %v877 = vld [vmem:[%s437 + $0x4] sm:$0xf]
      %v878 = vld [vmem:[%s437 + $0x8] sm:$0xf]
      %v879 = vld [vmem:[%s437 + $0xc] sm:$0xf]
      %v880 = vld [vmem:[%s437 + $0x10] sm:$0xf]
      %v881 = vld [vmem:[%s437 + $0x14] sm:$0xf]
      %v882 = vld [vmem:[%s437 + $0x18] sm:$0xf]
      %v883 = vld [vmem:[%s437 + $0x1c] sm:$0xf]
      %885 = vrot.lane.b32.xlu0 %v556, 64
      %v886 = vpop.permute.xlu0 %885
      %888 = vrot.lane.b32.xlu0 %v661, 64
      %v889 = vpop.permute.xlu0 %888
      %v891 = vsel %vm767, %v886, 0
      %v894 = vsel %vm767, %v889, 0
      %896 = vmatprep.subr.bf16.mxu0 0
      %897 = vmatpush1.bf16.xpose.msra.mxu0 %v894
      %898 = vmatprep.subr.bf16.mxu0 0
      %899 = vmatpush1.bf16.xpose.msra.mxu0 0
      %900 = vmatprep.subr.bf16.mxu0 0
      %901 = vmatpush1.bf16.xpose.msra.mxu0 0
      %902 = vmatprep.subr.bf16.mxu0 0
      %903 = vmatpush1.bf16.xpose.msra.mxu0 0
      %904 = vmatprep.subr.bf16.mxu0 0
      %905 = vmatpush1.bf16.xpose.msra.mxu0 0
      %906 = vmatprep.subr.bf16.mxu0 0
      %907 = vmatpush1.bf16.xpose.msra.mxu0 0
      %908 = vmatprep.subr.bf16.mxu0 0
      %909 = vmatpush1.bf16.xpose.msra.mxu0 0
      %910 = vmatprep.subr.bf16.mxu0 0
      %911 = vmatpush1.bf16.xpose.msra.mxu0 0
      %912 = vmatprep.subr.bf16.mxu0 0
      %913 = vmatpush1.bf16.xpose.msra.mxu0 0
      %914 = vmatprep.subr.bf16.mxu0 0
      %915 = vmatpush1.bf16.xpose.msra.mxu0 0
      %916 = vmatprep.subr.bf16.mxu0 0
      %917 = vmatpush1.bf16.xpose.msra.mxu0 0
      %918 = vmatprep.subr.bf16.mxu0 0
      %919 = vmatpush1.bf16.xpose.msra.mxu0 0
      %920 = vmatprep.subr.bf16.mxu0 0
      %921 = vmatpush1.bf16.xpose.msra.mxu0 0
      %922 = vmatprep.subr.bf16.mxu0 0
      %923 = vmatpush1.bf16.xpose.msra.mxu0 0
      %924 = vmatprep.subr.bf16.mxu0 0
      %925 = vmatpush1.bf16.xpose.msra.mxu0 0
      %926 = vmatprep.subr.bf16.mxu0 0
      %927 = vmatpush1.bf16.xpose.msra.mxu0 0
      %928 = vmatprep.mubr.bf16.mxu0 0
      %929 = vmatmul.mubr.bf16.gmra.mrb[0].mxu0 %v891
      %v930 = vpop.f32.mrb[0].mxu0
      %v931 = vadd.f32 0.0, %v930
      %v932 = vpop.f32.mrb[0].mxu0
      %v933 = vpop.f32.mrb[0].mxu0
      %v934 = vpop.f32.mrb[0].mxu0
      %935 = vdwg.mxu0
      %v936 = vmul.f32 %v931, 0.125
      %v937 = vsel %vm815, %v936, -inf
      %938 = vmax.xlane.f32.xlu0 %v937
      %v939 = vpop.xlane.xlu0 %938
      %v940 = vsub.f32 %v936, %v939
      %v941 = vmul.f32 %v940, 1.442695
      %v942 = vpow.pop %v941
      %v943 = vsel %vm815, %v942, 0.0
      %944 = vadd.xlane.f32.xlu0 %v943
      %v945 = vpop.xlane.xlu0 %944
      %v946 = vrcp.pop %v945
      %v947 = vmul.f32 %v942, %v946
      %v948 = vpack.c.bf16 %v947, %v947
      %950 = vrot.lane.b32.xlu0 %v766, 64
      %v951 = vpop.permute.xlu0 %950
      %v953 = vsel %vm815, %v948, 0
      %v956 = vsel %vm831, %v951, 0
      %958 = vmatprep.subr.bf16.mxu0 0
      %959 = vmatpush1.bf16.msra.mxu0 %v956
      %960 = vmatprep.subr.bf16.mxu0 0
      %961 = vmatpush1.bf16.msra.mxu0 0
      %962 = vmatprep.subr.bf16.mxu0 0
      %963 = vmatpush1.bf16.msra.mxu0 0
      %964 = vmatprep.subr.bf16.mxu0 0
      %965 = vmatpush1.bf16.msra.mxu0 0
      %966 = vmatprep.subr.bf16.mxu0 0
      %967 = vmatpush1.bf16.msra.mxu0 0
      %968 = vmatprep.subr.bf16.mxu0 0
      %969 = vmatpush1.bf16.msra.mxu0 0
      %970 = vmatprep.subr.bf16.mxu0 0
      %971 = vmatpush1.bf16.msra.mxu0 0
      %972 = vmatprep.subr.bf16.mxu0 0
      %973 = vmatpush1.bf16.msra.mxu0 0
      %974 = vmatprep.subr.bf16.mxu0 0
      %975 = vmatpush1.bf16.msra.mxu0 0
      %976 = vmatprep.subr.bf16.mxu0 0
      %977 = vmatpush1.bf16.msra.mxu0 0
      %978 = vmatprep.subr.bf16.mxu0 0
      %979 = vmatpush1.bf16.msra.mxu0 0
      %980 = vmatprep.subr.bf16.mxu0 0
      %981 = vmatpush1.bf16.msra.mxu0 0
      %982 = vmatprep.subr.bf16.mxu0 0
      %983 = vmatpush1.bf16.msra.mxu0 0
      %984 = vmatprep.subr.bf16.mxu0 0
      %985 = vmatpush1.bf16.msra.mxu0 0
      %986 = vmatprep.subr.bf16.mxu0 0
      %987 = vmatpush1.bf16.msra.mxu0 0
      %988 = vmatprep.subr.bf16.mxu0 0
      %989 = vmatpush1.bf16.msra.mxu0 0
      %990 = vmatprep.mubr.bf16.mxu0 0
      %991 = vmatmul.mubr.bf16.gmra.mrb[0].mxu0 %v953
      %v992 = vpop.f32.mrb[0].mxu0
      %v993 = vadd.f32 0.0, %v992
      %v994 = vpop.f32.mrb[0].mxu0
      %v995 = vpop.f32.mrb[0].mxu0
      %v996 = vpop.f32.mrb[0].mxu0
      %997 = vdwg.mxu0
      %v998 = vpack.c.bf16 %v993, %v993
      %v999 = vld [vmem:[%s437 + $0x20] sm:$0xf]
      %v1000 = vld [vmem:[%s437 + $0x24] sm:$0xf]
      %v1001 = vld [vmem:[%s437 + $0x28] sm:$0xf]
      %v1002 = vld [vmem:[%s437 + $0x2c] sm:$0xf]
      %v1003 = vld [vmem:[%s437 + $0x30] sm:$0xf]
      %v1004 = vld [vmem:[%s437 + $0x34] sm:$0xf]
      %v1005 = vld [vmem:[%s437 + $0x38] sm:$0xf]
      %v1006 = vld [vmem:[%s437 + $0x3c] sm:$0xf]
      %v1015 = vunpack.c.l.b16 %v999
      %v1016 = vunpack.c.l.b16 %v1000
      %v1017 = vunpack.c.l.b16 %v1001
      %v1018 = vunpack.c.l.b16 %v1002
      %v1019 = vunpack.c.l.b16 %v1003
      %v1020 = vunpack.c.l.b16 %v1004
      %v1021 = vunpack.c.l.b16 %v1005
      %v1022 = vunpack.c.l.b16 %v1006
      %v1023 = vpack.c.b16 %v1016, %v1015
      %v1024 = vpack.c.b16 %v1018, %v1017
      %v1025 = vpack.c.b16 %v1020, %v1019
      %v1026 = vpack.c.b16 %v1022, %v1021
      %v1032 = vsel %vm767, %v998, 0
      %1034 = vmatprep.subr.bf16.mxu0 0
      %1035 = vmatpush1.bf16.msra.mxu0 %v1023
      %1036 = vmatprep.subr.bf16.mxu0 0
      %1037 = vmatpush1.bf16.msra.mxu0 %v1024
      %1038 = vmatprep.subr.bf16.mxu0 0
      %1039 = vmatpush1.bf16.msra.mxu0 %v1025
      %1040 = vmatprep.subr.bf16.mxu0 0
      %1041 = vmatpush1.bf16.msra.mxu0 %v1026
      %1042 = vmatprep.subr.bf16.mxu0 0
      %1043 = vmatpush1.bf16.msra.mxu0 0
      %1044 = vmatprep.subr.bf16.mxu0 0
      %1045 = vmatpush1.bf16.msra.mxu0 0
      %1046 = vmatprep.subr.bf16.mxu0 0
      %1047 = vmatpush1.bf16.msra.mxu0 0
      %1048 = vmatprep.subr.bf16.mxu0 0
      %1049 = vmatpush1.bf16.msra.mxu0 0
      %1050 = vmatprep.subr.bf16.mxu0 0
      %1051 = vmatpush1.bf16.msra.mxu0 0
      %1052 = vmatprep.subr.bf16.mxu0 0
      %1053 = vmatpush1.bf16.msra.mxu0 0
      %1054 = vmatprep.subr.bf16.mxu0 0
      %1055 = vmatpush1.bf16.msra.mxu0 0
      %1056 = vmatprep.subr.bf16.mxu0 0
      %1057 = vmatpush1.bf16.msra.mxu0 0
      %1058 = vmatprep.subr.bf16.mxu0 0
      %1059 = vmatpush1.bf16.msra.mxu0 0
      %1060 = vmatprep.subr.bf16.mxu0 0
      %1061 = vmatpush1.bf16.msra.mxu0 0
      %1062 = vmatprep.subr.bf16.mxu0 0
      %1063 = vmatpush1.bf16.msra.mxu0 0
      %1064 = vmatprep.subr.bf16.mxu0 0
      %1065 = vmatpush1.bf16.msra.mxu0 0
      %1066 = vmatprep.mubr.bf16.mxu0 0
      %1067 = vmatmul.mubr.bf16.gmra.mrb[0].mxu0 %v1032
      %v1068 = vpop.f32.mrb[0].mxu0
      %v1069 = vadd.f32 0.0, %v1068
      %v1070 = vpop.f32.mrb[0].mxu0
      %v1071 = vpop.f32.mrb[0].mxu0
      %v1072 = vpop.f32.mrb[0].mxu0
      %1073 = vdwg.mxu0
      %v1082 = vunpack.c.l.b16 %v876
      %v1083 = vunpack.c.l.b16 %v877
      %v1084 = vunpack.c.l.b16 %v878
      %v1085 = vunpack.c.l.b16 %v879
      %v1086 = vunpack.c.l.b16 %v880
      %v1087 = vunpack.c.l.b16 %v881
      %v1088 = vunpack.c.l.b16 %v882
      %v1089 = vunpack.c.l.b16 %v883
      %v1090 = vpack.c.b16 %v1083, %v1082
      %v1091 = vpack.c.b16 %v1085, %v1084
      %v1092 = vpack.c.b16 %v1087, %v1086
      %v1093 = vpack.c.b16 %v1089, %v1088
      %v1099 = vsel %vm767, %v875, 0
      %1101 = vmatprep.subr.bf16.mxu0 0
      %1102 = vmatpush1.bf16.msra.mxu0 %v1090
      %1103 = vmatprep.subr.bf16.mxu0 0
      %1104 = vmatpush1.bf16.msra.mxu0 %v1091
      %1105 = vmatprep.subr.bf16.mxu0 0
      %1106 = vmatpush1.bf16.msra.mxu0 %v1092
      %1107 = vmatprep.subr.bf16.mxu0 0
      %1108 = vmatpush1.bf16.msra.mxu0 %v1093
      %1109 = vmatprep.subr.bf16.mxu0 0
      %1110 = vmatpush1.bf16.msra.mxu0 0
      %1111 = vmatprep.subr.bf16.mxu0 0
      %1112 = vmatpush1.bf16.msra.mxu0 0
      %1113 = vmatprep.subr.bf16.mxu0 0
      %1114 = vmatpush1.bf16.msra.mxu0 0
      %1115 = vmatprep.subr.bf16.mxu0 0
      %1116 = vmatpush1.bf16.msra.mxu0 0
      %1117 = vmatprep.subr.bf16.mxu0 0
      %1118 = vmatpush1.bf16.msra.mxu0 0
      %1119 = vmatprep.subr.bf16.mxu0 0
      %1120 = vmatpush1.bf16.msra.mxu0 0
      %1121 = vmatprep.subr.bf16.mxu0 0
      %1122 = vmatpush1.bf16.msra.mxu0 0
      %1123 = vmatprep.subr.bf16.mxu0 0
      %1124 = vmatpush1.bf16.msra.mxu0 0
      %1125 = vmatprep.subr.bf16.mxu0 0
      %1126 = vmatpush1.bf16.msra.mxu0 0
      %1127 = vmatprep.subr.bf16.mxu0 0
      %1128 = vmatpush1.bf16.msra.mxu0 0
      %1129 = vmatprep.subr.bf16.mxu0 0
      %1130 = vmatpush1.bf16.msra.mxu0 0
      %1131 = vmatprep.subr.bf16.mxu0 0
      %1132 = vmatpush1.bf16.msra.mxu0 0
      %1133 = vmatprep.mubr.bf16.mxu0 0
      %1134 = vmatmul.mubr.bf16.gmra.mrb[0].mxu0 %v1099
      %v1135 = vpop.f32.mrb[0].mxu0
      %v1136 = vadd.f32 %v1069, %v1135
      %v1137 = vpop.f32.mrb[0].mxu0
      %v1138 = vpop.f32.mrb[0].mxu0
      %v1139 = vpop.f32.mrb[0].mxu0
      %1140 = vdwg.mxu0
      %v1141 = vld [vmem:[%s440] sm:$0x1]
      %v1143 = vlaneseq
      %v1144 = vshrl.u32 %v1143, 7
      %v1145 = vsub.s32 0, %v1144
      %v1146 = vrot.slane %v1141, %v1145
      %v1148 = vadd.f32 %v1136, %v1146
      %1149 = vst [vmem:[%s448] sm:$0xff] %v1148
      %p1150 = scmp.lt.s32.totalorder %s22, 1
      %s1151 = scalar_select %p1150, %s22, 1
      %p1152 = scmp.lt.s32.totalorder %s23, 1
      %s1153 = scalar_select %p1152, %s23, 1
      %s1154 = smul.addr %s1151, 2
      %s1155 = sadd.s32 %s1153, %s1154
      %s1156 = smul.addr %s1155, 8
      %s1157 = scalar_lea.vmem %s7, %s1156
      // Predicated region
      $region49: #{cross_attention.1} parent=47 // pred_check
        %p1158 = pneg %p240
      $region50: #{cross_attention.1} parent=47 // pred_check_branch
        %1160 = sbr.rel (%p1158) target = $region52
      $region51: #{cross_attention.1} parent=47 // pred_region
        _
      $region52: #{cross_attention.1} parent=47 // pred_fallthru
        _
    $region48: #{cross_attention.1} parent=5 // pred_fallthru
      _
    %p1161 = scmp.le.s32.totalorder 2, %s13
    // Predicated region
    $region53: #{cross_attention.1} parent=5 // pred_check
      %p1162 = pneg %p1161
    $region54: #{cross_attention.1} parent=5 // pred_check_branch
      %1164 = sbr.rel (%p1162) target = $region56
    $region55: #{cross_attention.1} parent=5 // pred_region
      %s1165 = ssub.s32 %s13, 2
      // Predicated region
      $region57: #{cross_attention.1} parent=55 // pred_check
        %p1166 = pneg %p246
      $region58: #{cross_attention.1} parent=55 // pred_check_branch
        %1168 = sbr.rel (%p1166) target = $region60
      $region59: #{cross_attention.1} parent=55 // pred_region
        %p1169 = scmp.lt.s32.totalorder %s24, 1
        %s1170 = scalar_select %p1169, %s24, 1
        %p1171 = scmp.lt.s32.totalorder %s25, 1
        %s1172 = scalar_select %p1171, %s25, 1
        %s1173 = smul.addr %s1170, 2
        %s1174 = sadd.s32 %s1172, %s1173
        %s1175 = smul.addr %s1174, 8
        %s1176 = scalar_lea.vmem %s7, %s1175
      $region60: #{cross_attention.1} parent=55 // pred_fallthru
        _
    $region56: #{cross_attention.1} parent=5 // pred_fallthru
      _
  $region6: #{cross_attention.1} parent=0 // loop_footer
    %s17 = sadd.s32 1, %s13
  $region7: #{cross_attention.1} parent=0 // loop_footer_branch
    %12 = sbr.rel target = $region3
  $region8: #{cross_attention.1} parent=0 // loop_exit
    _

</llo_original>
